<compile_context>
chip_gen: v6e
topology: v6e:2x2x1
jax: 0.10.0
libtpu: 0.0.40
codegen_flags: <defaults>
</compile_context>

<pallas_src>
import functools

import numpy as np
import jax
import jax.numpy as jnp
from jax import lax
from jax.experimental import pallas as pl
from jax.experimental.pallas import tpu as pltpu

LANE = 128


def _rup(x, m):
    return ((x + m - 1) // m) * m


# ----------------------------------------------------------------------------
# Generic tiled matmul (+bias, +optional ReLU) — used for the final 1x1x1 conv
# ----------------------------------------------------------------------------

def _matmul_bias_act_kernel(x_ref, w_ref, b_ref, o_ref, *, act):
    acc = jnp.dot(x_ref[...].astype(jnp.bfloat16), w_ref[...],
                  preferred_element_type=jnp.float32)
    acc = acc + b_ref[...]
    if act:
        acc = jnp.maximum(acc, 0.0)
    o_ref[...] = acc


def matmul_bias_act(x, w, b, *, act=False, tm=512):
    """y = act(x @ w + b);  x:[M,K] (f32 or bf16), w:[K,Nout], b:[Nout].  Lane-dense out."""
    M, K = x.shape
    Nout = w.shape[1]
    NP = _rup(Nout, LANE)
    if NP != Nout:
        w = jnp.pad(w, ((0, 0), (0, NP - Nout)))
        b = jnp.pad(b.reshape(-1), (0, NP - Nout))
    wb = w.astype(jnp.bfloat16)
    b2 = b.reshape(1, NP).astype(jnp.float32)
    tm = min(tm, _rup(M, 8))
    Mp = _rup(M, tm)
    if Mp != M:
        x = jnp.pad(x, ((0, Mp - M), (0, 0)))
    out = pl.pallas_call(
        functools.partial(_matmul_bias_act_kernel, act=act),
        out_shape=jax.ShapeDtypeStruct((Mp, NP), jnp.float32),
        grid=(Mp // tm,),
        in_specs=[
            pl.BlockSpec((tm, K), lambda i: (i, 0)),
            pl.BlockSpec((K, NP), lambda i: (0, 0)),
            pl.BlockSpec((1, NP), lambda i: (0, 0)),
        ],
        out_specs=pl.BlockSpec((tm, NP), lambda i: (i, 0)),
        compiler_params=pltpu.CompilerParams(
            dimension_semantics=("parallel",),
            vmem_limit_bytes=32 * 1024 * 1024),
    )(x, wb, b2)
    out = out[:M]
    return out if NP == Nout else out[:, :Nout]


# ----------------------------------------------------------------------------
# ResnetBlockFC (fused; lane-padded bf16 output)
# ----------------------------------------------------------------------------

def _resnet_block_kernel(x_ref, w0_ref, b0_ref, w1_ref, b1_ref, ws_ref, o_ref):
    """out = shortcut(x) + fc_1(relu(fc_0(relu(x)))); output columns padded to 128."""
    x = x_ref[...]
    xa = jnp.maximum(x, 0.0)
    net = jnp.dot(xa.astype(jnp.bfloat16), w0_ref[...],
                  preferred_element_type=jnp.float32) + b0_ref[...]
    dx = jnp.dot(jnp.maximum(net, 0.0).astype(jnp.bfloat16), w1_ref[...],
                 preferred_element_type=jnp.float32) + b1_ref[...]
    xs = jnp.dot(x.astype(jnp.bfloat16), ws_ref[...],
                 preferred_element_type=jnp.float32)
    o_ref[...] = (xs + dx).astype(o_ref.dtype)


def resnet_block_fc(x, p, *, tm=512):
    """x:[M, f_dim] f32 -> bf16 [M, HP] (hidden padded to a multiple of 128; pads are 0)."""
    x = x.astype(jnp.float32)
    M, f = x.shape
    h_mid = p["w0"].shape[1]
    hp = p["w1"].shape[1]
    tm = min(tm, _rup(M, 8))
    Mp = _rup(M, tm)
    if Mp != M:
        x = jnp.pad(x, ((0, Mp - M), (0, 0)))
    out = pl.pallas_call(
        _resnet_block_kernel,
        out_shape=jax.ShapeDtypeStruct((Mp, hp), jnp.bfloat16),
        grid=(Mp // tm,),
        in_specs=[
            pl.BlockSpec((tm, f), lambda i: (i, 0)),
            pl.BlockSpec((f, h_mid), lambda i: (0, 0)),
            pl.BlockSpec((1, h_mid), lambda i: (0, 0)),
            pl.BlockSpec((h_mid, hp), lambda i: (0, 0)),
            pl.BlockSpec((1, hp), lambda i: (0, 0)),
            pl.BlockSpec((f, hp), lambda i: (0, 0)),
        ],
        out_specs=pl.BlockSpec((tm, hp), lambda i: (i, 0)),
        compiler_params=pltpu.CompilerParams(dimension_semantics=("parallel",)),
    )(x, p["w0"], p["b0"], p["w1"], p["b1"], p["ws"])
    return out[:M]


# ----------------------------------------------------------------------------
# Vectorized scatter-max pooling fused with conv_out (1x1x1 conv), P-tiled
# ----------------------------------------------------------------------------

def _scatter_conv_kernel(idx_ref, h_ref, w_ref, b_ref, o_ref, pool_ref, *, tv):
    """Grid = (N, voxel_tiles, point_tiles[arbitrary]).  For one batch / one tile of tv
    voxels: running masked max over the point tiles kept in pool_ref (bf16), 8 voxels
    produced per fori_loop step as a full (8, HP) store; on the last point tile the
    pooled features go through conv_out (bf16 MXU matmul, f32 acc) into o_ref."""
    p_id = pl.program_id(2)
    last_p = pl.num_programs(2) - 1
    ids = idx_ref[...]                                   # [tp, 1] i32 (padded points: -1)
    h = h_ref[...]                                       # [tp, HP] bf16
    base = pl.program_id(1) * tv
    neg = jnp.asarray(-jnp.inf, jnp.bfloat16)

    @pl.when(p_id == 0)
    def _():
        pool_ref[...] = jnp.full(pool_ref.shape, -jnp.inf, pool_ref.dtype)

    def body(j8, carry):
        v0 = base + j8 * 8
        rows = [jnp.max(jnp.where(ids == (v0 + r), h, neg), axis=0, keepdims=True)
                for r in range(8)]                       # 8 x [1, HP]
        blk = jnp.concatenate(rows, axis=0)              # [8, HP] full-sublane block
        off = pl.multiple_of(j8 * 8, 8)
        pool_ref[pl.ds(off, 8), :] = jnp.maximum(pool_ref[pl.ds(off, 8), :], blk)
        return carry

    lax.fori_loop(0, tv // 8, body, 0, unroll=True)

    @pl.when(p_id == last_p)
    def _():
        pooled = pool_ref[...]
        # TODO(synk): torch_scatter's historical fill_value=0 clamps negative per-voxel
        # maxima to 0; here touched voxels keep their true (possibly negative) max and
        # only untouched voxels become 0 (same convention as the previous kernel).
        pooled = jnp.where(pooled == neg, jnp.asarray(0.0, pooled.dtype), pooled)
        o_ref[...] = (jnp.dot(pooled, w_ref[...], preferred_element_type=jnp.float32)
                      + b_ref[...]).astype(o_ref.dtype)


def scatter_max_conv_out(index, h, num_cells, w, b):
    """index:[N,P] i32, h:[N,P,HP] bf16 -> conv_out(scatter_max(h)) : [N, num_cells, CP] bf16."""
    N, P, HP = h.shape
    CP = w.shape[1]
    tv = 64
    Vp = _rup(num_cells, tv)
    tp = min(_rup(P, 8), 2048)                           # point-tile (VMEM-bounded)
    Pp = _rup(P, tp)
    h = h.astype(jnp.bfloat16)
    idx3 = index.reshape(N, P, 1).astype(jnp.int32)
    if Pp != P:
        idx3 = jnp.pad(idx3, ((0, 0), (0, Pp - P), (0, 0)), constant_values=-1)
        h = jnp.pad(h, ((0, 0), (0, Pp - P), (0, 0)))
    cost = pl.CostEstimate(
        flops=int(2 * N * Vp * HP * CP + N * Vp * Pp * HP),
        transcendentals=0,
        bytes_accessed=int(N * Pp * HP * 2 + N * Pp * 4 + N * Vp * CP * 2 + HP * CP * 2))
    out = pl.pallas_call(
        functools.partial(_scatter_conv_kernel, tv=tv),
        out_shape=jax.ShapeDtypeStruct((N, Vp, CP), jnp.bfloat16),
        grid=(N, Vp // tv, Pp // tp),
        in_specs=[
            pl.BlockSpec((None, tp, 1), lambda n, t, p: (n, p, 0)),
            pl.BlockSpec((None, tp, HP), lambda n, t, p: (n, p, 0)),
            pl.BlockSpec((HP, CP), lambda n, t, p: (0, 0)),
            pl.BlockSpec((1, CP), lambda n, t, p: (0, 0)),
        ],
        out_specs=pl.BlockSpec((None, tv, CP), lambda n, t, p: (n, t, 0)),
        scratch_shapes=[pltpu.VMEM((tv, HP), jnp.bfloat16)],
        compiler_params=pltpu.CompilerParams(
            dimension_semantics=("parallel", "parallel", "arbitrary"),
            vmem_limit_bytes=32 * 1024 * 1024),
        cost_estimate=cost,
    )(idx3, h, w, b)
    return out[:, :num_cells, :]


# ----------------------------------------------------------------------------
# Fused GroupNorm -> 3x3x3 conv (pad=1, bias-free) -> ReLU (pytorch-3dunet 'gcr')
# ----------------------------------------------------------------------------

@functools.lru_cache(maxsize=None)
def _conv_tap_masks(side):
    """Per-tap validity masks for a 3x3x3 / pad=1 conv on a row-major flattened volume."""
    V = side ** 3
    r = np.arange(V)
    d, h, w = r // (side * side), (r // side) % side, r % side
    masks = []
    for dd in (-1, 0, 1):
        for dh in (-1, 0, 1):
            for dw in (-1, 0, 1):
                ok = ((d + dd >= 0) & (d + dd < side) & (h + dh >= 0) & (h + dh < side)
                      & (w + dw >= 0) & (w + dw < side))
                masks.append(ok.astype(np.float32))
    return np.stack(masks)[:, :, None]                    # [27, V, 1]


def _gn_conv3x3_relu_kernel(x_ref, gam_ref, bet_ref, gmat_ref, mask_ref, w_ref,
                            o_ref, hal_ref, acc_ref, *, side, n_per_group, halo):
    """One batch volume, channels-last flat [V, CP] (padded channels are exactly zero)."""
    V = side ** 3
    HW, W = side * side, side
    CP = o_ref.shape[1]

    # ---- GroupNorm ('g'), centered two-pass stats in f32 (no E[x^2]-E[x]^2 cancellation)
    x = x_ref[...].astype(jnp.float32)                                     # [V, CP]
    inv_n = 1.0 / n_per_group
    gs1 = jnp.dot(jnp.sum(x, axis=0, keepdims=True), gmat_ref[...],
                  preferred_element_type=jnp.float32)                      # group sums
    mean = gs1 * inv_n
    xc = x - mean
    gs2 = jnp.dot(jnp.sum(xc * xc, axis=0, keepdims=True), gmat_ref[...],
                  preferred_element_type=jnp.float32)
    inv = lax.rsqrt(gs2 * inv_n + 1e-5)                                    # nn.GroupNorm eps
    xn = xc * (inv * gam_ref[...]) + bet_ref[...]                          # [V, CP] f32

    # ---- stage the normalized volume into 3 zero-haloed bf16 planes (dw = -1/0/+1);
    #      cast hoisted (3 casts, not 27); all 27 tap reads below are ALIGNED static slices
    zero_blk = jnp.zeros((halo, CP), jnp.bfloat16)
    for m, dw in enumerate((-1, 0, 1)):
        hal_ref[m, pl.ds(0, halo), :] = zero_blk
        hal_ref[m, pl.ds(halo + V, halo), :] = zero_blk
        plane = xn if dw == 0 else pltpu.roll(xn, (-dw) % V, axis=0)
        hal_ref[m, pl.ds(halo, V), :] = plane.astype(jnp.bfloat16)

    # ---- 27-tap conv ('c'): bf16 MXU matmuls, f32 VMEM scratch accumulator; per-tap
    #      validity mask applied to the f32 partial product (covers halo / h,w wrap rows)
    k = 0
    for dd in (-1, 0, 1):
        for dh in (-1, 0, 1):
            for dw in (-1, 0, 1):
                tap = hal_ref[dw + 1, pl.ds(halo + dd * HW + dh * W, V), :]
                contrib = jnp.dot(tap, w_ref[k],
                                  preferred_element_type=jnp.float32) * mask_ref[k]
                if k == 0:
                    acc_ref[...] = contrib
                else:
                    acc_ref[...] += contrib
                k += 1

    # ---- ReLU ('r')
    o_ref[...] = jnp.maximum(acc_ref[...], 0.0).astype(o_ref.dtype)


def gn_conv3x3_relu(x, lp, side):
    """pytorch-3dunet SingleConv (order 'gcr') on a channels-last flat grid [N, V, CP] bf16."""
    N, V, CP = x.shape
    halo = _rup(side * side + side, 8)
    masks_np = _conv_tap_masks(side)
    npg = float((lp["c_real"] // lp["groups"]) * V)
    cost = pl.CostEstimate(
        flops=int(2 * 27 * N * V * CP * CP),
        transcendentals=int(N * CP),
        bytes_accessed=int(2 * N * V * CP * 2 + 27 * CP * CP * 2 + 27 * V * 4 + CP * CP * 4))
    # TODO(synk): at large reso, tile the volume along depth (haloed D-blocks, 'parallel'
    # grid axis) so blocks fit v7x's 64 MiB VMEM instead of one whole-volume block/batch.
    return pl.pallas_call(
        functools.partial(_gn_conv3x3_relu_kernel, side=side,
                          n_per_group=npg, halo=halo),
        out_shape=jax.ShapeDtypeStruct((N, V, CP), jnp.bfloat16),
        grid=(N,),
        in_specs=[
            pl.BlockSpec((None, V, CP), lambda n: (n, 0, 0)),
            pl.BlockSpec((1, CP), lambda n: (0, 0)),
            pl.BlockSpec((1, CP), lambda n: (0, 0)),
            pl.BlockSpec((CP, CP), lambda n: (0, 0)),
            pl.BlockSpec((27, V, 1), lambda n: (0, 0, 0)),
            pl.BlockSpec((27, CP, CP), lambda n: (0, 0, 0)),
        ],
        out_specs=pl.BlockSpec((None, V, CP), lambda n: (n, 0, 0)),
        scratch_shapes=[pltpu.VMEM((3, V + 2 * halo, CP), jnp.bfloat16),
                        pltpu.VMEM((V, CP), jnp.float32)],
        compiler_params=pltpu.CompilerParams(
            dimension_semantics=("parallel",),
            vmem_limit_bytes=32 * 1024 * 1024),
        cost_estimate=cost,
    )(x.astype(jnp.bfloat16), lp["gamma"], lp["beta"], lp["gmat"],
      jnp.asarray(masks_np), lp["w"])


# ----------------------------------------------------------------------------
# U-Net glue (channels-last, lane-padded channel axis, bf16 intermediates)
# ----------------------------------------------------------------------------

def max_pool3d_2(x):
    n, d, h, w, c = x.shape
    return x.reshape(n, d // 2, 2, h // 2, 2, w // 2, 2, c).max(axis=(2, 4, 6))


def upsample_nearest_2(x):
    for ax in (1, 2, 3):
        x = jnp.repeat(x, 2, axis=ax)
    return x
    # TODO(synk): fold this nearest-neighbor upsample + skip concat into the dec1
    # gn_conv input (index_map / in-kernel gather) to avoid the full-volume HBM round-trip.


def double_conv(x, p, side):
    return gn_conv3x3_relu(gn_conv3x3_relu(x, p["c1"], side), p["c2"], side)


def unet3d(x, p, reso):
    """Compact pytorch-3dunet UNet3D: f_maps=(c_dim, 2*c_dim), num_levels=2, order 'gcr',
    2x max-pool down, nearest-neighbor up + channel concat, final 1x1x1 conv, no final act.
    TODO(synk): pytorch-3dunet defaults are f_maps=64 / num_levels=4; configured compactly
    via unet3d_kwargs for these small synthetic shapes."""
    N, V, CP = x.shape
    half = reso // 2
    f0, f1 = p["f0"], p["f1"]
    e1 = double_conv(x, p["enc1"], reso)                                   # [N, V, CP]
    x2 = max_pool3d_2(e1.reshape(N, reso, reso, reso, CP)).reshape(N, half ** 3, CP)
    e2 = double_conv(x2, p["enc2"], half)                                  # [N, half^3, CP]
    up = upsample_nearest_2(e2.reshape(N, half, half, half, CP)).reshape(N, V, CP)
    cat = jnp.concatenate([e1[..., :f0], up[..., :f1]], axis=-1)           # skip first
    cat = jnp.pad(cat, ((0, 0), (0, 0), (0, CP - (f0 + f1))))
    d1 = double_conv(cat, p["dec1"], reso)
    y = matmul_bias_act(d1.reshape(N * V, CP), p["final_w"], p["final_b"], act=False)
    return y.reshape(N, reso, reso, reso, -1)                              # [N,r,r,r,c_dim]


# ----------------------------------------------------------------------------
# Coordinate helpers (tiny elementwise glue)
# ----------------------------------------------------------------------------

def pad_and_crop_coordinate3d(p, padding):
    # TODO(synk): exact source of pad_and_crop_coordinate3d not provided; following
    # ConvONet's normalize_3d_coordinate convention (shrink unit cube by (1+padding), crop).
    p = (p - 0.5) / (1.0 + padding) + 0.5
    return jnp.clip(p, 0.0, 1.0 - 1e-6)


def coordinate3d_to_index(coord, reso):
    x = jnp.floor(coord * reso).astype(jnp.int32)
    x = jnp.clip(x, 0, reso - 1)
    return x[..., 0] + reso * (x[..., 1] + reso * x[..., 2])               # [N, P]


# ----------------------------------------------------------------------------
# RLEncoder forward
# ----------------------------------------------------------------------------

def rl_encoder_forward(params, normalized_points, feature, *, reso, padding):
    N, P, f_dim = feature.shape
    V = reso ** 3
    HP = params["hp"]

    coord = pad_and_crop_coordinate3d(normalized_points, padding)
    index = coordinate3d_to_index(coord, reso)                             # [N, P]

    # resnet_in: per-point ResnetBlockFC (fused Pallas kernel, lane-padded bf16 output)
    h = resnet_block_fc(feature.reshape(N * P, f_dim), params["resnet"])
    h = h.reshape(N, P, HP)

    # pool_local + conv_out fused: vectorized, P-tiled scatter-max onto the reso^3 grid
    # followed by the 1x1x1 conv -> channels-last U-Net input grid [N, V, CP] (bf16).
    grid0 = scatter_max_conv_out(index, h, V,
                                 params["conv_out_w"], params["conv_out_b"])

    out = unet3d(grid0, params["unet"], reso)                              # [N, r, r, r, c_dim]
    return out.transpose(0, 4, 1, 2, 3)                                    # NCDHW like PyTorch


# ----------------------------------------------------------------------------
# Deterministic parameter construction (padded / pre-packed layouts)
# ----------------------------------------------------------------------------

def _dense(key, shape, scale=0.1):
    return scale * jax.random.normal(key, shape, jnp.float32)


def init_params(key, f_dim, c_dim, hidden_dim):
    ks = iter(jax.random.split(key, 32))
    h_mid = min(f_dim, hidden_dim)                 # ResnetBlockFC size_h
    HP = _rup(hidden_dim, LANE)
    f0, f1 = c_dim, 2 * c_dim
    CP = _rup(max(c_dim, f0, f1, f0 + f1), LANE)   # single lane-padded width for the U-Net

    # ResnetBlockFC: pad output (hidden) axis to HP with zero columns -> padded point
    # feature channels are exactly zero downstream.
    w1 = jnp.pad(_dense(next(ks), (h_mid, hidden_dim)), ((0, 0), (0, HP - hidden_dim)))
    ws = jnp.pad(_dense(next(ks), (f_dim, hidden_dim)), ((0, 0), (0, HP - hidden_dim)))
    resnet = dict(
        w0=_dense(next(ks), (f_dim, h_mid)).astype(jnp.bfloat16),
        b0=jnp.zeros((1, h_mid), jnp.float32),
        w1=w1.astype(jnp.bfloat16),
        b1=jnp.zeros((1, HP), jnp.float32),
        ws=ws.astype(jnp.bfloat16),                # shortcut (no bias)
    )

    # conv_out (Conv3d 1x1x1): [hidden, c_dim] embedded in [HP, CP] (zeros elsewhere).
    cw = np.zeros((HP, CP), np.float32)
    cw[:hidden_dim, :c_dim] = np.asarray(_dense(next(ks), (hidden_dim, c_dim)))
    conv_out_w = jnp.asarray(cw).astype(jnp.bfloat16)
    conv_out_b = jnp.zeros((1, CP), jnp.float32)

    def single_conv_params(cin, cout, groups=8):
        # pytorch-3dunet SingleConv, order 'gcr': GroupNorm(cin) -> Conv3d(bias=False) -> ReLU
        g = groups if cin >= groups else 1
        cg = cin // g
        wt = np.asarray(_dense(next(ks), (cout, cin, 3, 3, 3)))    # PyTorch Conv3d layout
        w = np.zeros((27, CP, CP), np.float32)
        k = 0
        for kd in range(3):
            for kh in range(3):
                for kw in range(3):
                    w[k, :cin, :cout] = wt[:, :, kd, kh, kw].T
                    k += 1
        gamma = np.zeros((1, CP), np.float32)
        gamma[0, :cin] = 1.0
        beta = np.zeros((1, CP), np.float32)
        gm = np.zeros((CP, CP), np.float32)
        cid = np.arange(cin)
        gm[:cin, :cin] = ((cid[:, None] // cg) == (cid[None, :] // cg)).astype(np.float32)
        return dict(w=jnp.asarray(w).astype(jnp.bfloat16),
                    gamma=jnp.asarray(gamma), beta=jnp.asarray(beta),
                    gmat=jnp.asarray(gm), c_real=int(cin), groups=int(g))

    def enc_double(cin, cout):
        mid = max(cout // 2, cin)                  # pytorch-3dunet encoder DoubleConv rule
        return dict(c1=single_conv_params(cin, mid), c2=single_conv_params(mid, cout))

    def dec_double(cin, cout):
        return dict(c1=single_conv_params(cin, cout), c2=single_conv_params(cout, cout))

    fw = np.zeros((CP, c_dim), np.float32)
    fw[:f0, :] = np.asarray(_dense(next(ks), (f0, c_dim)))
    unet = dict(
        enc1=enc_double(c_dim, f0),
        enc2=enc_double(f0, f1),
        dec1=dec_double(f0 + f1, f0),
        final_w=jnp.asarray(fw),
        final_b=jnp.zeros((c_dim,), jnp.float32),
        f0=f0, f1=f1,
    )
    return dict(resnet=resnet, conv_out_w=conv_out_w, conv_out_b=conv_out_b,
                unet=unet, hp=HP, cp=CP)


# ----------------------------------------------------------------------------

if __name__ == "__main__":
    N, P = 2, 128
    f_dim, c_dim, hidden_dim = 8, 16, 32
    reso, padding = 8, 0.02

    key = jax.random.PRNGKey(0)
    kp, kx, kf = jax.random.split(key, 3)

    params = init_params(kp, f_dim, c_dim, hidden_dim)
    normalized_points = jax.random.uniform(kx, (N, P, 3), jnp.float32)    # ~[0, 1]
    feature = jax.random.normal(kf, (N, P, f_dim), jnp.float32)

    out = rl_encoder_forward(params, normalized_points, feature,
                             reso=reso, padding=padding)
    out = jax.block_until_ready(out)
    assert out.shape == (N, c_dim, reso, reso, reso), out.shape
    assert bool(jnp.all(jnp.isfinite(out)))
    print("KERNEL_OK")
</pallas_src>

<mosaic_0001>
module attributes {stable_mosaic.version = 11 : i64} {
  func.func @_resnet_block_kernel(%arg0: i32, %arg1: memref<256x8xf32, #tpu.memory_space<vmem>>, %arg2: memref<8x8xbf16, #tpu.memory_space<vmem>>, %arg3: memref<1x8xf32, #tpu.memory_space<vmem>>, %arg4: memref<8x128xbf16, #tpu.memory_space<vmem>>, %arg5: memref<1x128xf32, #tpu.memory_space<vmem>>, %arg6: memref<8x128xbf16, #tpu.memory_space<vmem>>, %arg7: memref<256x128xbf16, #tpu.memory_space<vmem>>) attributes {dimension_semantics = [#tpu.dimension_semantics<parallel>], iteration_bounds = array<i64: 1>, scalar_prefetch = 0 : i64, scratch_operands = 0 : i64, tpu.core_type = #tpu.core_type<tc>, window_params = [{transform_indices = @transform_0, window_bounds = array<i64: 256, 8>}, {pipeline_mode = #tpu.pipeline_mode<synchronous>, transform_indices = @transform_1, window_bounds = array<i64: 8, 8>}, {pipeline_mode = #tpu.pipeline_mode<synchronous>, transform_indices = @transform_2, window_bounds = array<i64: 1, 8>}, {pipeline_mode = #tpu.pipeline_mode<synchronous>, transform_indices = @transform_3, window_bounds = array<i64: 8, 128>}, {pipeline_mode = #tpu.pipeline_mode<synchronous>, transform_indices = @transform_4, window_bounds = array<i64: 1, 128>}, {pipeline_mode = #tpu.pipeline_mode<synchronous>, transform_indices = @transform_5, window_bounds = array<i64: 8, 128>}, {transform_indices = @transform_6, window_bounds = array<i64: 256, 128>}]} {
    %c0 = arith.constant 0 : index
    %c0_0 = arith.constant 0 : index
    %0 = vector.load %arg1[%c0, %c0_0] : memref<256x8xf32, #tpu.memory_space<vmem>>, vector<256x8xf32>
    %cst = arith.constant 0.000000e+00 : f32
    %1 = vector.broadcast %cst : f32 to vector<256x8xf32>
    %2 = arith.maximumf %0, %1 : vector<256x8xf32>
    %3 = arith.truncf %2 : vector<256x8xf32> to vector<256x8xbf16>
    %c0_1 = arith.constant 0 : index
    %c0_2 = arith.constant 0 : index
    %4 = vector.load %arg2[%c0_1, %c0_2] : memref<8x8xbf16, #tpu.memory_space<vmem>>, vector<8x8xbf16>
    %cst_3 = arith.constant dense<0.000000e+00> : vector<256x8xf32>
    %5 = tpu.matmul %3, %4, %cst_3 {dimension_numbers = #tpu.dot_dimension_numbers<[1], [0], [0], [1], [0, 0, 1, 1], [], []>} : vector<256x8xbf16>, vector<8x8xbf16>, vector<256x8xf32> -> vector<256x8xf32>
    %c0_4 = arith.constant 0 : index
    %c0_5 = arith.constant 0 : index
    %6 = vector.load %arg3[%c0_4, %c0_5] : memref<1x8xf32, #tpu.memory_space<vmem>>, vector<1x8xf32>
    %7 = vector.broadcast %6 : vector<1x8xf32> to vector<256x8xf32>
    %8 = arith.addf %5, %7 : vector<256x8xf32>
    %cst_6 = arith.constant 0.000000e+00 : f32
    %9 = vector.broadcast %cst_6 : f32 to vector<256x8xf32>
    %10 = arith.maximumf %8, %9 : vector<256x8xf32>
    %11 = arith.truncf %10 : vector<256x8xf32> to vector<256x8xbf16>
    %c0_7 = arith.constant 0 : index
    %c0_8 = arith.constant 0 : index
    %12 = vector.load %arg4[%c0_7, %c0_8] : memref<8x128xbf16, #tpu.memory_space<vmem>>, vector<8x128xbf16>
    %cst_9 = arith.constant dense<0.000000e+00> : vector<256x128xf32>
    %13 = tpu.matmul %11, %12, %cst_9 {dimension_numbers = #tpu.dot_dimension_numbers<[1], [0], [0], [1], [0, 0, 1, 1], [], []>} : vector<256x8xbf16>, vector<8x128xbf16>, vector<256x128xf32> -> vector<256x128xf32>
    %c0_10 = arith.constant 0 : index
    %c0_11 = arith.constant 0 : index
    %14 = vector.load %arg5[%c0_10, %c0_11] : memref<1x128xf32, #tpu.memory_space<vmem>>, vector<1x128xf32>
    %15 = vector.broadcast %14 : vector<1x128xf32> to vector<256x128xf32>
    %16 = arith.addf %13, %15 : vector<256x128xf32>
    %17 = arith.truncf %0 : vector<256x8xf32> to vector<256x8xbf16>
    %c0_12 = arith.constant 0 : index
    %c0_13 = arith.constant 0 : index
    %18 = vector.load %arg6[%c0_12, %c0_13] : memref<8x128xbf16, #tpu.memory_space<vmem>>, vector<8x128xbf16>
    %cst_14 = arith.constant dense<0.000000e+00> : vector<256x128xf32>
    %19 = tpu.matmul %17, %18, %cst_14 {dimension_numbers = #tpu.dot_dimension_numbers<[1], [0], [0], [1], [0, 0, 1, 1], [], []>} : vector<256x8xbf16>, vector<8x128xbf16>, vector<256x128xf32> -> vector<256x128xf32>
    %20 = arith.addf %19, %16 : vector<256x128xf32>
    %21 = arith.truncf %20 : vector<256x128xf32> to vector<256x128xbf16>
    %c0_15 = arith.constant 0 : index
    %c0_16 = arith.constant 0 : index
    %22 = vector.load %arg7[%c0_15, %c0_16] : memref<256x128xbf16, #tpu.memory_space<vmem>>, vector<256x128xbf16>
    tpu.vector_store %arg7[%c0_15, %c0_16], %21 {strides = array<i32>} : memref<256x128xbf16, #tpu.memory_space<vmem>>, vector<256x128xbf16>,
    return
  }
  func.func @transform_0(%arg0: i32) -> (i32, i32) {
    %c0_i32 = arith.constant 0 : i32
    %c0_i32_0 = arith.constant 0 : i32
    return %arg0, %c0_i32 : i32, i32
  }
  func.func @transform_1(%arg0: i32) -> (i32, i32) {
    %c0_i32 = arith.constant 0 : i32
    %c0_i32_0 = arith.constant 0 : i32
    %c0_i32_1 = arith.constant 0 : i32
    return %c0_i32, %c0_i32_0 : i32, i32
  }
  func.func @transform_2(%arg0: i32) -> (i32, i32) {
    %c0_i32 = arith.constant 0 : i32
    %c0_i32_0 = arith.constant 0 : i32
    %c0_i32_1 = arith.constant 0 : i32
    return %c0_i32, %c0_i32_0 : i32, i32
  }
  func.func @transform_3(%arg0: i32) -> (i32, i32) {
    %c0_i32 = arith.constant 0 : i32
    %c0_i32_0 = arith.constant 0 : i32
    %c0_i32_1 = arith.constant 0 : i32
    return %c0_i32, %c0_i32_0 : i32, i32
  }
  func.func @transform_4(%arg0: i32) -> (i32, i32) {
    %c0_i32 = arith.constant 0 : i32
    %c0_i32_0 = arith.constant 0 : i32
    %c0_i32_1 = arith.constant 0 : i32
    return %c0_i32, %c0_i32_0 : i32, i32
  }
  func.func @transform_5(%arg0: i32) -> (i32, i32) {
    %c0_i32 = arith.constant 0 : i32
    %c0_i32_0 = arith.constant 0 : i32
    %c0_i32_1 = arith.constant 0 : i32
    return %c0_i32, %c0_i32_0 : i32, i32
  }
  func.func @transform_6(%arg0: i32) -> (i32, i32) {
    %c0_i32 = arith.constant 0 : i32
    %c0_i32_0 = arith.constant 0 : i32
    return %arg0, %c0_i32 : i32, i32
  }
}

</mosaic_0001>

<llo_original>
// kernel: tpu_custom_call.1
$region0: #{tpu_custom_call.1}
  #allocation0 [shape = 'u32[]', space=smem, size = 0x4, offset = 0x4, fixed_abs, tag = 'smem constant byte address 0x4 - core index']
  #allocation1 [shape = 'u32[144,128]{1,0:T(1,128)}', space=vmem, size = 0x12000, scoped, tag = 'internal scratch']
  %s0 = inlined_call_operand.vmem [shape: f32[256,8], index: 0, kind: input, shape index: {}]
  %s1 = inlined_call_operand.vmem [shape: bf16[8,8], index: 1, kind: input, shape index: {}]
  %s2 = inlined_call_operand.vmem [shape: f32[1,8], index: 2, kind: input, shape index: {}]
  %s3 = inlined_call_operand.vmem [shape: bf16[8,128], index: 3, kind: input, shape index: {}]
  %s4 = inlined_call_operand.vmem [shape: f32[1,128], index: 4, kind: input, shape index: {}]
  %s5 = inlined_call_operand.vmem [shape: bf16[8,128], index: 5, kind: input, shape index: {}]
  %s6 = inlined_call_operand.hbm [shape: bf16[256,128], index: 6, kind: output, shape index: {}]
  %s7 = sld [smem:[#allocation0]]
  $region34: #{tpu_custom_call.1} parent=0
    _
  %s9 = ssub.s32 1, %s7
  %s10 = scalar_select 0, %s9, %s7
  $region1: #{tpu_custom_call.1} parent=0
    #allocation2 [shape = 'u8[65536]{0}', space=vmem, size = 0x10000, scoped, tag = 'output window, operand 0, single buffered']
    #allocation3 [shape = 's32[1]{0}', space=sflag, size = 0x4, scoped, tag = 'scoped memory for tpu_custom_call.1']
    %11 = vsyncpa [#allocation3], 0
    // Predicated region
    $region2: #{tpu_custom_call.1} parent=1 // pred_check
      _
    $region3: #{tpu_custom_call.1} parent=1 // pred_check_branch
      %13 = sbr.rel (0) target = $region5
    $region4: #{tpu_custom_call.1} parent=1 // pred_region
      _
    $region5: #{tpu_custom_call.1} parent=1 // pred_fallthru
      _
    // Predicated region
    $region6: #{tpu_custom_call.1} parent=1 // pred_check
      _
    $region7: #{tpu_custom_call.1} parent=1 // pred_check_branch
      %15 = sbr.rel (0) target = $region9
    $region8: #{tpu_custom_call.1} parent=1 // pred_region
      _
    $region9: #{tpu_custom_call.1} parent=1 // pred_fallthru
      _
    // Predicated region
    $region10: #{tpu_custom_call.1} parent=1 // pred_check
      _
    $region11: #{tpu_custom_call.1} parent=1 // pred_check_branch
      %17 = sbr.rel (0) target = $region13
    $region12: #{tpu_custom_call.1} parent=1 // pred_region
      _
    $region13: #{tpu_custom_call.1} parent=1 // pred_fallthru
      _
    // Predicated region
    $region14: #{tpu_custom_call.1} parent=1 // pred_check
      _
    $region15: #{tpu_custom_call.1} parent=1 // pred_check_branch
      %19 = sbr.rel (0) target = $region17
    $region16: #{tpu_custom_call.1} parent=1 // pred_region
      _
    $region17: #{tpu_custom_call.1} parent=1 // pred_fallthru
      _
    // Predicated region
    $region18: #{tpu_custom_call.1} parent=1 // pred_check
      _
    $region19: #{tpu_custom_call.1} parent=1 // pred_check_branch
      %21 = sbr.rel (0) target = $region21
    $region20: #{tpu_custom_call.1} parent=1 // pred_region
      _
    $region21: #{tpu_custom_call.1} parent=1 // pred_fallthru
      _
    // Predicated region
    $region22: #{tpu_custom_call.1} parent=1 // pred_check
      _
    $region23: #{tpu_custom_call.1} parent=1 // pred_check_branch
      %23 = sbr.rel (0) target = $region25
    $region24: #{tpu_custom_call.1} parent=1 // pred_region
      _
    $region25: #{tpu_custom_call.1} parent=1 // pred_fallthru
      _
    %v25 = vld [vmem:[%s0] sm:$0xff]
    %v26 = vld [vmem:[%s0 + $0x8] sm:$0xff]
    %v27 = vld [vmem:[%s0 + $0x10] sm:$0xff]
    %v28 = vld [vmem:[%s0 + $0x18] sm:$0xff]
    %v29 = vld [vmem:[%s0 + $0x20] sm:$0xff]
    %v30 = vld [vmem:[%s0 + $0x28] sm:$0xff]
    %v31 = vld [vmem:[%s0 + $0x30] sm:$0xff]
    %v32 = vld [vmem:[%s0 + $0x38] sm:$0xff]
    %v33 = vld [vmem:[%s0 + $0x40] sm:$0xff]
    %v34 = vld [vmem:[%s0 + $0x48] sm:$0xff]
    %v35 = vld [vmem:[%s0 + $0x50] sm:$0xff]
    %v36 = vld [vmem:[%s0 + $0x58] sm:$0xff]
    %v37 = vld [vmem:[%s0 + $0x60] sm:$0xff]
    %v38 = vld [vmem:[%s0 + $0x68] sm:$0xff]
    %v39 = vld [vmem:[%s0 + $0x70] sm:$0xff]
    %v40 = vld [vmem:[%s0 + $0x78] sm:$0xff]
    %v41 = vld [vmem:[%s0 + $0x80] sm:$0xff]
    %v42 = vld [vmem:[%s0 + $0x88] sm:$0xff]
    %v43 = vld [vmem:[%s0 + $0x90] sm:$0xff]
    %v44 = vld [vmem:[%s0 + $0x98] sm:$0xff]
    %v45 = vld [vmem:[%s0 + $0xa0] sm:$0xff]
    %v46 = vld [vmem:[%s0 + $0xa8] sm:$0xff]
    %v47 = vld [vmem:[%s0 + $0xb0] sm:$0xff]
    %v48 = vld [vmem:[%s0 + $0xb8] sm:$0xff]
    %v49 = vld [vmem:[%s0 + $0xc0] sm:$0xff]
    %v50 = vld [vmem:[%s0 + $0xc8] sm:$0xff]
    %v51 = vld [vmem:[%s0 + $0xd0] sm:$0xff]
    %v52 = vld [vmem:[%s0 + $0xd8] sm:$0xff]
    %v53 = vld [vmem:[%s0 + $0xe0] sm:$0xff]
    %v54 = vld [vmem:[%s0 + $0xe8] sm:$0xff]
    %v55 = vld [vmem:[%s0 + $0xf0] sm:$0xff]
    %v56 = vld [vmem:[%s0 + $0xf8] sm:$0xff]
    %v57 = vmax.f32 %v25, 0.0
    %v58 = vmax.f32 %v26, 0.0
    %v59 = vmax.f32 %v27, 0.0
    %v60 = vmax.f32 %v28, 0.0
    %v61 = vmax.f32 %v29, 0.0
    %v62 = vmax.f32 %v30, 0.0
    %v63 = vmax.f32 %v31, 0.0
    %v64 = vmax.f32 %v32, 0.0
    %v65 = vmax.f32 %v33, 0.0
    %v66 = vmax.f32 %v34, 0.0
    %v67 = vmax.f32 %v35, 0.0
    %v68 = vmax.f32 %v36, 0.0
    %v69 = vmax.f32 %v37, 0.0
    %v70 = vmax.f32 %v38, 0.0
    %v71 = vmax.f32 %v39, 0.0
    %v72 = vmax.f32 %v40, 0.0
    %v73 = vmax.f32 %v41, 0.0
    %v74 = vmax.f32 %v42, 0.0
    %v75 = vmax.f32 %v43, 0.0
    %v76 = vmax.f32 %v44, 0.0
    %v77 = vmax.f32 %v45, 0.0
    %v78 = vmax.f32 %v46, 0.0
    %v79 = vmax.f32 %v47, 0.0
    %v80 = vmax.f32 %v48, 0.0
    %v81 = vmax.f32 %v49, 0.0
    %v82 = vmax.f32 %v50, 0.0
    %v83 = vmax.f32 %v51, 0.0
    %v84 = vmax.f32 %v52, 0.0
    %v85 = vmax.f32 %v53, 0.0
    %v86 = vmax.f32 %v54, 0.0
    %v87 = vmax.f32 %v55, 0.0
    %v88 = vmax.f32 %v56, 0.0
    %v89 = vpack.c.bf16 %v58, %v57
    %v90 = vpack.c.bf16 %v60, %v59
    %v91 = vpack.c.bf16 %v62, %v61
    %v92 = vpack.c.bf16 %v64, %v63
    %v93 = vpack.c.bf16 %v66, %v65
    %v94 = vpack.c.bf16 %v68, %v67
    %v95 = vpack.c.bf16 %v70, %v69
    %v96 = vpack.c.bf16 %v72, %v71
    %v97 = vpack.c.bf16 %v74, %v73
    %v98 = vpack.c.bf16 %v76, %v75
    %v99 = vpack.c.bf16 %v78, %v77
    %v100 = vpack.c.bf16 %v80, %v79
    %v101 = vpack.c.bf16 %v82, %v81
    %v102 = vpack.c.bf16 %v84, %v83
    %v103 = vpack.c.bf16 %v86, %v85
    %v104 = vpack.c.bf16 %v88, %v87
    %v105 = vld [vmem:[%s1] sm:$0xf]
    %v106 = vld [vmem:[%s2] sm:$0x1]
    %v108 = vlaneseq
    %v109 = vshrl.u32 %v108, 7
    %v110 = vsub.s32 0, %v109
    %v111 = vrot.slane %v106, %v110
    %vm113 = vcmask 64512
    %v115 = vsel %vm113, %v89, 0
    %v118 = vsel %vm113, %v90, 0
    %v121 = vsel %vm113, %v91, 0
    %v124 = vsel %vm113, %v92, 0
    %v127 = vsel %vm113, %v93, 0
    %v130 = vsel %vm113, %v94, 0
    %v133 = vsel %vm113, %v95, 0
    %v136 = vsel %vm113, %v96, 0
    %v139 = vsel %vm113, %v97, 0
    %v142 = vsel %vm113, %v98, 0
    %v145 = vsel %vm113, %v99, 0
    %v148 = vsel %vm113, %v100, 0
    %v151 = vsel %vm113, %v101, 0
    %v154 = vsel %vm113, %v102, 0
    %v157 = vsel %vm113, %v103, 0
    %v160 = vsel %vm113, %v104, 0
    %vm162 = vcmask 1043456
    %v164 = vsel %vm162, %v105, 0
    %166 = vmatprep.subr.bf16.mxu0 0
    %167 = vmatpush1.bf16.msra.mxu0 0
    %168 = vmatprep.subr.bf16.mxu0 0
    %169 = vmatpush1.bf16.msra.mxu0 0
    %170 = vmatprep.subr.bf16.mxu0 0
    %171 = vmatpush1.bf16.msra.mxu0 0
    %172 = vmatprep.subr.bf16.mxu0 0
    %173 = vmatpush1.bf16.msra.mxu0 0
    %174 = vmatprep.subr.bf16.mxu0 0
    %175 = vmatpush1.bf16.msra.mxu0 0
    %176 = vmatprep.subr.bf16.mxu0 0
    %177 = vmatpush1.bf16.msra.mxu0 0
    %178 = vmatprep.subr.bf16.mxu0 0
    %179 = vmatpush1.bf16.msra.mxu0 0
    %180 = vmatprep.subr.bf16.mxu0 0
    %181 = vmatpush1.bf16.msra.mxu0 %v164
    %182 = vmatprep.subr.bf16.mxu0 0
    %183 = vmatpush2.bf16.msra.mxu0 0
    %184 = vmatprep.subr.bf16.mxu0 0
    %185 = vmatpush2.bf16.msra.mxu0 0
    %186 = vmatprep.subr.bf16.mxu0 0
    %187 = vmatpush2.bf16.msra.mxu0 0
    %188 = vmatprep.subr.bf16.mxu0 0
    %189 = vmatpush2.bf16.msra.mxu0 0
    %190 = vmatprep.subr.bf16.mxu0 0
    %191 = vmatpush2.bf16.msra.mxu0 0
    %192 = vmatprep.subr.bf16.mxu0 0
    %193 = vmatpush2.bf16.msra.mxu0 0
    %194 = vmatprep.subr.bf16.mxu0 0
    %195 = vmatpush2.bf16.msra.mxu0 0
    %196 = vmatprep.subr.bf16.mxu0 0
    %197 = vmatpush2.bf16.msra.mxu0 0
    %198 = vmatprep.mubr.bf16.mxu0 0
    %199 = vmatmul.mubr.bf16.gmra.mxu0 %v115
    %v200 = vpop.f32.mrf.mxu0
    %v201 = vadd.f32 %v111, %v200
    %v202 = vpop.f32.mrf.mxu0
    %v203 = vpop.f32.mrf.mxu0
    %v204 = vadd.f32 %v111, %v203
    %v205 = vpop.f32.mrf.mxu0
    %206 = vmatprep.mubr.bf16.mxu0 0
    %207 = vmatmul.mubr.bf16.gmra.mxu0 %v118
    %v208 = vpop.f32.mrf.mxu0
    %v209 = vadd.f32 %v111, %v208
    %v210 = vpop.f32.mrf.mxu0
    %v211 = vpop.f32.mrf.mxu0
    %v212 = vadd.f32 %v111, %v211
    %v213 = vpop.f32.mrf.mxu0
    %214 = vmatprep.mubr.bf16.mxu0 0
    %215 = vmatmul.mubr.bf16.gmra.mxu0 %v121
    %v216 = vpop.f32.mrf.mxu0
    %v217 = vadd.f32 %v111, %v216
    %v218 = vpop.f32.mrf.mxu0
    %v219 = vpop.f32.mrf.mxu0
    %v220 = vadd.f32 %v111, %v219
    %v221 = vpop.f32.mrf.mxu0
    %222 = vmatprep.mubr.bf16.mxu0 0
    %223 = vmatmul.mubr.bf16.gmra.mxu0 %v124
    %v224 = vpop.f32.mrf.mxu0
    %v225 = vadd.f32 %v111, %v224
    %v226 = vpop.f32.mrf.mxu0
    %v227 = vpop.f32.mrf.mxu0
    %v228 = vadd.f32 %v111, %v227
    %v229 = vpop.f32.mrf.mxu0
    %230 = vmatprep.mubr.bf16.mxu0 0
    %231 = vmatmul.mubr.bf16.gmra.mxu0 %v127
    %v232 = vpop.f32.mrf.mxu0
    %v233 = vadd.f32 %v111, %v232
    %v234 = vpop.f32.mrf.mxu0
    %v235 = vpop.f32.mrf.mxu0
    %v236 = vadd.f32 %v111, %v235
    %v237 = vpop.f32.mrf.mxu0
    %238 = vmatprep.mubr.bf16.mxu0 0
    %239 = vmatmul.mubr.bf16.gmra.mxu0 %v130
    %v240 = vpop.f32.mrf.mxu0
    %v241 = vadd.f32 %v111, %v240
    %v242 = vpop.f32.mrf.mxu0
    %v243 = vpop.f32.mrf.mxu0
    %v244 = vadd.f32 %v111, %v243
    %v245 = vpop.f32.mrf.mxu0
    %246 = vmatprep.mubr.bf16.mxu0 0
    %247 = vmatmul.mubr.bf16.gmra.mxu0 %v133
    %v248 = vpop.f32.mrf.mxu0
    %v249 = vadd.f32 %v111, %v248
    %v250 = vpop.f32.mrf.mxu0
    %v251 = vpop.f32.mrf.mxu0
    %v252 = vadd.f32 %v111, %v251
    %v253 = vpop.f32.mrf.mxu0
    %254 = vmatprep.mubr.bf16.mxu0 0
    %255 = vmatmul.mubr.bf16.gmra.mxu0 %v136
    %v256 = vpop.f32.mrf.mxu0
    %v257 = vadd.f32 %v111, %v256
    %v258 = vpop.f32.mrf.mxu0
    %v259 = vpop.f32.mrf.mxu0
    %v260 = vadd.f32 %v111, %v259
    %v261 = vpop.f32.mrf.mxu0
    %262 = vmatprep.mubr.bf16.mxu0 0
    %263 = vmatmul.mubr.bf16.gmra.mxu0 %v139
    %v264 = vpop.f32.mrf.mxu0
    %v265 = vadd.f32 %v111, %v264
    %v266 = vpop.f32.mrf.mxu0
    %v267 = vpop.f32.mrf.mxu0
    %v268 = vadd.f32 %v111, %v267
    %v269 = vpop.f32.mrf.mxu0
    %270 = vmatprep.mubr.bf16.mxu0 0
    %271 = vmatmul.mubr.bf16.gmra.mxu0 %v142
    %v272 = vpop.f32.mrf.mxu0
    %v273 = vadd.f32 %v111, %v272
    %v274 = vpop.f32.mrf.mxu0
    %v275 = vpop.f32.mrf.mxu0
    %v276 = vadd.f32 %v111, %v275
    %v277 = vpop.f32.mrf.mxu0
    %278 = vmatprep.mubr.bf16.mxu0 0
    %279 = vmatmul.mubr.bf16.gmra.mxu0 %v145
    %v280 = vpop.f32.mrf.mxu0
    %v281 = vadd.f32 %v111, %v280
    %v282 = vpop.f32.mrf.mxu0
    %v283 = vpop.f32.mrf.mxu0
    %v284 = vadd.f32 %v111, %v283
    %v285 = vpop.f32.mrf.mxu0
    %286 = vmatprep.mubr.bf16.mxu0 0
    %287 = vmatmul.mubr.bf16.gmra.mxu0 %v148
    %v288 = vpop.f32.mrf.mxu0
    %v289 = vadd.f32 %v111, %v288
    %v290 = vpop.f32.mrf.mxu0
    %v291 = vpop.f32.mrf.mxu0
    %v292 = vadd.f32 %v111, %v291
    %v293 = vpop.f32.mrf.mxu0
    %294 = vmatprep.mubr.bf16.mxu0 0
    %295 = vmatmul.mubr.bf16.gmra.mxu0 %v151
    %v296 = vpop.f32.mrf.mxu0
    %v297 = vadd.f32 %v111, %v296
    %v298 = vpop.f32.mrf.mxu0
    %v299 = vpop.f32.mrf.mxu0
    %v300 = vadd.f32 %v111, %v299
    %v301 = vpop.f32.mrf.mxu0
    %302 = vmatprep.mubr.bf16.mxu0 0
    %303 = vmatmul.mubr.bf16.gmra.mxu0 %v154
    %v304 = vpop.f32.mrf.mxu0
    %v305 = vadd.f32 %v111, %v304
    %v306 = vpop.f32.mrf.mxu0
    %v307 = vpop.f32.mrf.mxu0
    %v308 = vadd.f32 %v111, %v307
    %v309 = vpop.f32.mrf.mxu0
    %310 = vmatprep.mubr.bf16.mxu0 0
    %311 = vmatmul.mubr.bf16.gmra.mxu0 %v157
    %v312 = vpop.f32.mrf.mxu0
    %v313 = vadd.f32 %v111, %v312
    %v314 = vpop.f32.mrf.mxu0
    %v315 = vpop.f32.mrf.mxu0
    %v316 = vadd.f32 %v111, %v315
    %v317 = vpop.f32.mrf.mxu0
    %318 = vmatprep.mubr.bf16.mxu0 0
    %319 = vmatmul.mubr.bf16.gmra.mxu0 %v160
    %v320 = vpop.f32.mrf.mxu0
    %v321 = vadd.f32 %v111, %v320
    %v322 = vpop.f32.mrf.mxu0
    %v323 = vpop.f32.mrf.mxu0
    %v324 = vadd.f32 %v111, %v323
    %v325 = vpop.f32.mrf.mxu0
    %326 = vdwg.mxu0
    %v327 = vmax.f32 %v201, 0.0
    %v328 = vmax.f32 %v204, 0.0
    %v329 = vmax.f32 %v209, 0.0
    %v330 = vmax.f32 %v212, 0.0
    %v331 = vmax.f32 %v217, 0.0
    %v332 = vmax.f32 %v220, 0.0
    %v333 = vmax.f32 %v225, 0.0
    %v334 = vmax.f32 %v228, 0.0
    %v335 = vmax.f32 %v233, 0.0
    %v336 = vmax.f32 %v236, 0.0
    %v337 = vmax.f32 %v241, 0.0
    %v338 = vmax.f32 %v244, 0.0
    %v339 = vmax.f32 %v249, 0.0
    %v340 = vmax.f32 %v252, 0.0
    %v341 = vmax.f32 %v257, 0.0
    %v342 = vmax.f32 %v260, 0.0
    %v343 = vmax.f32 %v265, 0.0
    %v344 = vmax.f32 %v268, 0.0
    %v345 = vmax.f32 %v273, 0.0
    %v346 = vmax.f32 %v276, 0.0
    %v347 = vmax.f32 %v281, 0.0
    %v348 = vmax.f32 %v284, 0.0
    %v349 = vmax.f32 %v289, 0.0
    %v350 = vmax.f32 %v292, 0.0
    %v351 = vmax.f32 %v297, 0.0
    %v352 = vmax.f32 %v300, 0.0
    %v353 = vmax.f32 %v305, 0.0
    %v354 = vmax.f32 %v308, 0.0
    %v355 = vmax.f32 %v313, 0.0
    %v356 = vmax.f32 %v316, 0.0
    %v357 = vmax.f32 %v321, 0.0
    %v358 = vmax.f32 %v324, 0.0
    %v359 = vpack.c.bf16 %v328, %v327
    %v360 = vpack.c.bf16 %v330, %v329
    %v361 = vpack.c.bf16 %v332, %v331
    %v362 = vpack.c.bf16 %v334, %v333
    %v363 = vpack.c.bf16 %v336, %v335
    %v364 = vpack.c.bf16 %v338, %v337
    %v365 = vpack.c.bf16 %v340, %v339
    %v366 = vpack.c.bf16 %v342, %v341
    %v367 = vpack.c.bf16 %v344, %v343
    %v368 = vpack.c.bf16 %v346, %v345
    %v369 = vpack.c.bf16 %v348, %v347
    %v370 = vpack.c.bf16 %v350, %v349
    %v371 = vpack.c.bf16 %v352, %v351
    %v372 = vpack.c.bf16 %v354, %v353
    %v373 = vpack.c.bf16 %v356, %v355
    %v374 = vpack.c.bf16 %v358, %v357
    %v375 = vld [vmem:[%s3] sm:$0xf]
    %v376 = vld [vmem:[%s4] sm:$0x1]
    %v378 = vlaneseq
    %v379 = vshrl.u32 %v378, 7
    %v380 = vsub.s32 0, %v379
    %v381 = vrot.slane %v376, %v380
    %v384 = vsel %vm113, %v359, 0
    %v387 = vsel %vm113, %v360, 0
    %v390 = vsel %vm113, %v361, 0
    %v393 = vsel %vm113, %v362, 0
    %v396 = vsel %vm113, %v363, 0
    %v399 = vsel %vm113, %v364, 0
    %v402 = vsel %vm113, %v365, 0
    %v405 = vsel %vm113, %v366, 0
    %v408 = vsel %vm113, %v367, 0
    %v411 = vsel %vm113, %v368, 0
    %v414 = vsel %vm113, %v369, 0
    %v417 = vsel %vm113, %v370, 0
    %v420 = vsel %vm113, %v371, 0
    %v423 = vsel %vm113, %v372, 0
    %v426 = vsel %vm113, %v373, 0
    %v429 = vsel %vm113, %v374, 0
    %v432 = vsel %vm162, %v375, 0
    %434 = vmatprep.subr.bf16.mxu0 0
    %435 = vmatpush1.bf16.msra.mxu0 0
    %436 = vmatprep.subr.bf16.mxu0 0
    %437 = vmatpush1.bf16.msra.mxu0 0
    %438 = vmatprep.subr.bf16.mxu0 0
    %439 = vmatpush1.bf16.msra.mxu0 0
    %440 = vmatprep.subr.bf16.mxu0 0
    %441 = vmatpush1.bf16.msra.mxu0 0
    %442 = vmatprep.subr.bf16.mxu0 0
    %443 = vmatpush1.bf16.msra.mxu0 0
    %444 = vmatprep.subr.bf16.mxu0 0
    %445 = vmatpush1.bf16.msra.mxu0 0
    %446 = vmatprep.subr.bf16.mxu0 0
    %447 = vmatpush1.bf16.msra.mxu0 0
    %448 = vmatprep.subr.bf16.mxu0 0
    %449 = vmatpush1.bf16.msra.mxu0 %v432
    %450 = vmatprep.subr.bf16.mxu0 0
    %451 = vmatpush2.bf16.msra.mxu0 0
    %452 = vmatprep.subr.bf16.mxu0 0
    %453 = vmatpush2.bf16.msra.mxu0 0
    %454 = vmatprep.subr.bf16.mxu0 0
    %455 = vmatpush2.bf16.msra.mxu0 0
    %456 = vmatprep.subr.bf16.mxu0 0
    %457 = vmatpush2.bf16.msra.mxu0 0
    %458 = vmatprep.subr.bf16.mxu0 0
    %459 = vmatpush2.bf16.msra.mxu0 0
    %460 = vmatprep.subr.bf16.mxu0 0
    %461 = vmatpush2.bf16.msra.mxu0 0
    %462 = vmatprep.subr.bf16.mxu0 0
    %463 = vmatpush2.bf16.msra.mxu0 0
    %464 = vmatprep.subr.bf16.mxu0 0
    %465 = vmatpush2.bf16.msra.mxu0 0
    %466 = vmatprep.mubr.bf16.mxu0 0
    %467 = vmatmul.mubr.bf16.gmra.mxu0 %v384
    %v468 = vpop.f32.mrf.mxu0
    %v469 = vadd.f32 %v381, %v468
    %v470 = vpop.f32.mrf.mxu0
    %v471 = vpop.f32.mrf.mxu0
    %v472 = vadd.f32 %v381, %v471
    %v473 = vpop.f32.mrf.mxu0
    %474 = vmatprep.mubr.bf16.mxu0 0
    %475 = vmatmul.mubr.bf16.gmra.mxu0 %v387
    %v476 = vpop.f32.mrf.mxu0
    %v477 = vadd.f32 %v381, %v476
    %v478 = vpop.f32.mrf.mxu0
    %v479 = vpop.f32.mrf.mxu0
    %v480 = vadd.f32 %v381, %v479
    %v481 = vpop.f32.mrf.mxu0
    %482 = vmatprep.mubr.bf16.mxu0 0
    %483 = vmatmul.mubr.bf16.gmra.mxu0 %v390
    %v484 = vpop.f32.mrf.mxu0
    %v485 = vadd.f32 %v381, %v484
    %v486 = vpop.f32.mrf.mxu0
    %v487 = vpop.f32.mrf.mxu0
    %v488 = vadd.f32 %v381, %v487
    %v489 = vpop.f32.mrf.mxu0
    %490 = vmatprep.mubr.bf16.mxu0 0
    %491 = vmatmul.mubr.bf16.gmra.mxu0 %v393
    %v492 = vpop.f32.mrf.mxu0
    %v493 = vadd.f32 %v381, %v492
    %v494 = vpop.f32.mrf.mxu0
    %v495 = vpop.f32.mrf.mxu0
    %v496 = vadd.f32 %v381, %v495
    %v497 = vpop.f32.mrf.mxu0
    %498 = vmatprep.mubr.bf16.mxu0 0
    %499 = vmatmul.mubr.bf16.gmra.mxu0 %v396
    %v500 = vpop.f32.mrf.mxu0
    %v501 = vadd.f32 %v381, %v500
    %v502 = vpop.f32.mrf.mxu0
    %v503 = vpop.f32.mrf.mxu0
    %v504 = vadd.f32 %v381, %v503
    %v505 = vpop.f32.mrf.mxu0
    %506 = vmatprep.mubr.bf16.mxu0 0
    %507 = vmatmul.mubr.bf16.gmra.mxu0 %v399
    %v508 = vpop.f32.mrf.mxu0
    %v509 = vadd.f32 %v381, %v508
    %v510 = vpop.f32.mrf.mxu0
    %v511 = vpop.f32.mrf.mxu0
    %v512 = vadd.f32 %v381, %v511
    %v513 = vpop.f32.mrf.mxu0
    %514 = vmatprep.mubr.bf16.mxu0 0
    %515 = vmatmul.mubr.bf16.gmra.mxu0 %v402
    %v516 = vpop.f32.mrf.mxu0
    %v517 = vadd.f32 %v381, %v516
    %v518 = vpop.f32.mrf.mxu0
    %v519 = vpop.f32.mrf.mxu0
    %v520 = vadd.f32 %v381, %v519
    %v521 = vpop.f32.mrf.mxu0
    %522 = vmatprep.mubr.bf16.mxu0 0
    %523 = vmatmul.mubr.bf16.gmra.mxu0 %v405
    %v524 = vpop.f32.mrf.mxu0
    %v525 = vadd.f32 %v381, %v524
    %v526 = vpop.f32.mrf.mxu0
    %v527 = vpop.f32.mrf.mxu0
    %v528 = vadd.f32 %v381, %v527
    %v529 = vpop.f32.mrf.mxu0
    %530 = vmatprep.mubr.bf16.mxu0 0
    %531 = vmatmul.mubr.bf16.gmra.mxu0 %v408
    %v532 = vpop.f32.mrf.mxu0
    %v533 = vadd.f32 %v381, %v532
    %v534 = vpop.f32.mrf.mxu0
    %v535 = vpop.f32.mrf.mxu0
    %v536 = vadd.f32 %v381, %v535
    %v537 = vpop.f32.mrf.mxu0
    %538 = vmatprep.mubr.bf16.mxu0 0
    %539 = vmatmul.mubr.bf16.gmra.mxu0 %v411
    %v540 = vpop.f32.mrf.mxu0
    %v541 = vadd.f32 %v381, %v540
    %v542 = vpop.f32.mrf.mxu0
    %v543 = vpop.f32.mrf.mxu0
    %v544 = vadd.f32 %v381, %v543
    %v545 = vpop.f32.mrf.mxu0
    %546 = vmatprep.mubr.bf16.mxu0 0
    %547 = vmatmul.mubr.bf16.gmra.mxu0 %v414
    %v548 = vpop.f32.mrf.mxu0
    %v549 = vadd.f32 %v381, %v548
    %v550 = vpop.f32.mrf.mxu0
    %v551 = vpop.f32.mrf.mxu0
    %v552 = vadd.f32 %v381, %v551
    %v553 = vpop.f32.mrf.mxu0
    %554 = vmatprep.mubr.bf16.mxu0 0
    %555 = vmatmul.mubr.bf16.gmra.mxu0 %v417
    %v556 = vpop.f32.mrf.mxu0
    %v557 = vadd.f32 %v381, %v556
    %v558 = vpop.f32.mrf.mxu0
    %v559 = vpop.f32.mrf.mxu0
    %v560 = vadd.f32 %v381, %v559
    %v561 = vpop.f32.mrf.mxu0
    %562 = vmatprep.mubr.bf16.mxu0 0
    %563 = vmatmul.mubr.bf16.gmra.mxu0 %v420
    %v564 = vpop.f32.mrf.mxu0
    %v565 = vadd.f32 %v381, %v564
    %v566 = vpop.f32.mrf.mxu0
    %v567 = vpop.f32.mrf.mxu0
    %v568 = vadd.f32 %v381, %v567
    %v569 = vpop.f32.mrf.mxu0
    %570 = vmatprep.mubr.bf16.mxu0 0
    %571 = vmatmul.mubr.bf16.gmra.mxu0 %v423
    %v572 = vpop.f32.mrf.mxu0
    %v573 = vadd.f32 %v381, %v572
    %v574 = vpop.f32.mrf.mxu0
    %v575 = vpop.f32.mrf.mxu0
    %v576 = vadd.f32 %v381, %v575
    %v577 = vpop.f32.mrf.mxu0
    %578 = vmatprep.mubr.bf16.mxu0 0
    %579 = vmatmul.mubr.bf16.gmra.mxu0 %v426
    %v580 = vpop.f32.mrf.mxu0
    %v581 = vadd.f32 %v381, %v580
    %v582 = vpop.f32.mrf.mxu0
    %v583 = vpop.f32.mrf.mxu0
    %v584 = vadd.f32 %v381, %v583
    %v585 = vpop.f32.mrf.mxu0
    %586 = vmatprep.mubr.bf16.mxu0 0
    %587 = vmatmul.mubr.bf16.gmra.mxu0 %v429
    %v588 = vpop.f32.mrf.mxu0
    %v589 = vadd.f32 %v381, %v588
    %v590 = vpop.f32.mrf.mxu0
    %v591 = vpop.f32.mrf.mxu0
    %v592 = vadd.f32 %v381, %v591
    %v593 = vpop.f32.mrf.mxu0
    %594 = vdwg.mxu0
    %v595 = vpack.c.bf16 %v26, %v25
    %v596 = vpack.c.bf16 %v28, %v27
    %v597 = vpack.c.bf16 %v30, %v29
    %v598 = vpack.c.bf16 %v32, %v31
    %v599 = vpack.c.bf16 %v34, %v33
    %v600 = vpack.c.bf16 %v36, %v35
    %v601 = vpack.c.bf16 %v38, %v37
    %v602 = vpack.c.bf16 %v40, %v39
    %v603 = vpack.c.bf16 %v42, %v41
    %v604 = vpack.c.bf16 %v44, %v43
    %v605 = vpack.c.bf16 %v46, %v45
    %v606 = vpack.c.bf16 %v48, %v47
    %v607 = vpack.c.bf16 %v50, %v49
    %v608 = vpack.c.bf16 %v52, %v51
    %v609 = vpack.c.bf16 %v54, %v53
    %v610 = vpack.c.bf16 %v56, %v55
    %v611 = vld [vmem:[%s5] sm:$0xf]
    %v613 = vsel %vm113, %v595, 0
    %v616 = vsel %vm113, %v596, 0
    %v619 = vsel %vm113, %v597, 0
    %v622 = vsel %vm113, %v598, 0
    %v625 = vsel %vm113, %v599, 0
    %v628 = vsel %vm113, %v600, 0
    %v631 = vsel %vm113, %v601, 0
    %v634 = vsel %vm113, %v602, 0
    %v637 = vsel %vm113, %v603, 0
    %v640 = vsel %vm113, %v604, 0
    %v643 = vsel %vm113, %v605, 0
    %v646 = vsel %vm113, %v606, 0
    %v649 = vsel %vm113, %v607, 0
    %v652 = vsel %vm113, %v608, 0
    %v655 = vsel %vm113, %v609, 0
    %v658 = vsel %vm113, %v610, 0
    %v661 = vsel %vm162, %v611, 0
    %663 = vmatprep.subr.bf16.mxu0 0
    %664 = vmatpush1.bf16.msra.mxu0 0
    %665 = vmatprep.subr.bf16.mxu0 0
    %666 = vmatpush1.bf16.msra.mxu0 0
    %667 = vmatprep.subr.bf16.mxu0 0
    %668 = vmatpush1.bf16.msra.mxu0 0
    %669 = vmatprep.subr.bf16.mxu0 0
    %670 = vmatpush1.bf16.msra.mxu0 0
    %671 = vmatprep.subr.bf16.mxu0 0
    %672 = vmatpush1.bf16.msra.mxu0 0
    %673 = vmatprep.subr.bf16.mxu0 0
    %674 = vmatpush1.bf16.msra.mxu0 0
    %675 = vmatprep.subr.bf16.mxu0 0
    %676 = vmatpush1.bf16.msra.mxu0 0
    %677 = vmatprep.subr.bf16.mxu0 0
    %678 = vmatpush1.bf16.msra.mxu0 %v661
    %679 = vmatprep.subr.bf16.mxu0 0
    %680 = vmatpush2.bf16.msra.mxu0 0
    %681 = vmatprep.subr.bf16.mxu0 0
    %682 = vmatpush2.bf16.msra.mxu0 0
    %683 = vmatprep.subr.bf16.mxu0 0
    %684 = vmatpush2.bf16.msra.mxu0 0
    %685 = vmatprep.subr.bf16.mxu0 0
    %686 = vmatpush2.bf16.msra.mxu0 0
    %687 = vmatprep.subr.bf16.mxu0 0
    %688 = vmatpush2.bf16.msra.mxu0 0
    %689 = vmatprep.subr.bf16.mxu0 0
    %690 = vmatpush2.bf16.msra.mxu0 0
    %691 = vmatprep.subr.bf16.mxu0 0
    %692 = vmatpush2.bf16.msra.mxu0 0
    %693 = vmatprep.subr.bf16.mxu0 0
    %694 = vmatpush2.bf16.msra.mxu0 0
    %695 = vmatprep.mubr.bf16.mxu0 0
    %696 = vmatmul.mubr.bf16.gmra.mxu0 %v613
    %v697 = vpop.f32.mrf.mxu0
    %v698 = vadd.f32 %v469, %v697
    %v699 = vpop.f32.mrf.mxu0
    %v700 = vpop.f32.mrf.mxu0
    %v701 = vadd.f32 %v472, %v700
    %v702 = vpop.f32.mrf.mxu0
    %703 = vmatprep.mubr.bf16.mxu0 0
    %704 = vmatmul.mubr.bf16.gmra.mxu0 %v616
    %v705 = vpop.f32.mrf.mxu0
    %v706 = vadd.f32 %v477, %v705
    %v707 = vpop.f32.mrf.mxu0
    %v708 = vpop.f32.mrf.mxu0
    %v709 = vadd.f32 %v480, %v708
    %v710 = vpop.f32.mrf.mxu0
    %711 = vmatprep.mubr.bf16.mxu0 0
    %712 = vmatmul.mubr.bf16.gmra.mxu0 %v619
    %v713 = vpop.f32.mrf.mxu0
    %v714 = vadd.f32 %v485, %v713
    %v715 = vpop.f32.mrf.mxu0
    %v716 = vpop.f32.mrf.mxu0
    %v717 = vadd.f32 %v488, %v716
    %v718 = vpop.f32.mrf.mxu0
    %719 = vmatprep.mubr.bf16.mxu0 0
    %720 = vmatmul.mubr.bf16.gmra.mxu0 %v622
    %v721 = vpop.f32.mrf.mxu0
    %v722 = vadd.f32 %v493, %v721
    %v723 = vpop.f32.mrf.mxu0
    %v724 = vpop.f32.mrf.mxu0
    %v725 = vadd.f32 %v496, %v724
    %v726 = vpop.f32.mrf.mxu0
    %727 = vmatprep.mubr.bf16.mxu0 0
    %728 = vmatmul.mubr.bf16.gmra.mxu0 %v625
    %v729 = vpop.f32.mrf.mxu0
    %v730 = vadd.f32 %v501, %v729
    %v731 = vpop.f32.mrf.mxu0
    %v732 = vpop.f32.mrf.mxu0
    %v733 = vadd.f32 %v504, %v732
    %v734 = vpop.f32.mrf.mxu0
    %735 = vmatprep.mubr.bf16.mxu0 0
    %736 = vmatmul.mubr.bf16.gmra.mxu0 %v628
    %v737 = vpop.f32.mrf.mxu0
    %v738 = vadd.f32 %v509, %v737
    %v739 = vpop.f32.mrf.mxu0
    %v740 = vpop.f32.mrf.mxu0
    %v741 = vadd.f32 %v512, %v740
    %v742 = vpop.f32.mrf.mxu0
    %743 = vmatprep.mubr.bf16.mxu0 0
    %744 = vmatmul.mubr.bf16.gmra.mxu0 %v631
    %v745 = vpop.f32.mrf.mxu0
    %v746 = vadd.f32 %v517, %v745
    %v747 = vpop.f32.mrf.mxu0
    %v748 = vpop.f32.mrf.mxu0
    %v749 = vadd.f32 %v520, %v748
    %v750 = vpop.f32.mrf.mxu0
    %751 = vmatprep.mubr.bf16.mxu0 0
    %752 = vmatmul.mubr.bf16.gmra.mxu0 %v634
    %v753 = vpop.f32.mrf.mxu0
    %v754 = vadd.f32 %v525, %v753
    %v755 = vpop.f32.mrf.mxu0
    %v756 = vpop.f32.mrf.mxu0
    %v757 = vadd.f32 %v528, %v756
    %v758 = vpop.f32.mrf.mxu0
    %759 = vmatprep.mubr.bf16.mxu0 0
    %760 = vmatmul.mubr.bf16.gmra.mxu0 %v637
    %v761 = vpop.f32.mrf.mxu0
    %v762 = vadd.f32 %v533, %v761
    %v763 = vpop.f32.mrf.mxu0
    %v764 = vpop.f32.mrf.mxu0
    %v765 = vadd.f32 %v536, %v764
    %v766 = vpop.f32.mrf.mxu0
    %767 = vmatprep.mubr.bf16.mxu0 0
    %768 = vmatmul.mubr.bf16.gmra.mxu0 %v640
    %v769 = vpop.f32.mrf.mxu0
    %v770 = vadd.f32 %v541, %v769
    %v771 = vpop.f32.mrf.mxu0
    %v772 = vpop.f32.mrf.mxu0
    %v773 = vadd.f32 %v544, %v772
    %v774 = vpop.f32.mrf.mxu0
    %775 = vmatprep.mubr.bf16.mxu0 0
    %776 = vmatmul.mubr.bf16.gmra.mxu0 %v643
    %v777 = vpop.f32.mrf.mxu0
    %v778 = vadd.f32 %v549, %v777
    %v779 = vpop.f32.mrf.mxu0
    %v780 = vpop.f32.mrf.mxu0
    %v781 = vadd.f32 %v552, %v780
    %v782 = vpop.f32.mrf.mxu0
    %783 = vmatprep.mubr.bf16.mxu0 0
    %784 = vmatmul.mubr.bf16.gmra.mxu0 %v646
    %v785 = vpop.f32.mrf.mxu0
    %v786 = vadd.f32 %v557, %v785
    %v787 = vpop.f32.mrf.mxu0
    %v788 = vpop.f32.mrf.mxu0
    %v789 = vadd.f32 %v560, %v788
    %v790 = vpop.f32.mrf.mxu0
    %791 = vmatprep.mubr.bf16.mxu0 0
    %792 = vmatmul.mubr.bf16.gmra.mxu0 %v649
    %v793 = vpop.f32.mrf.mxu0
    %v794 = vadd.f32 %v565, %v793
    %v795 = vpop.f32.mrf.mxu0
    %v796 = vpop.f32.mrf.mxu0
    %v797 = vadd.f32 %v568, %v796
    %v798 = vpop.f32.mrf.mxu0
    %799 = vmatprep.mubr.bf16.mxu0 0
    %800 = vmatmul.mubr.bf16.gmra.mxu0 %v652
    %v801 = vpop.f32.mrf.mxu0
    %v802 = vadd.f32 %v573, %v801
    %v803 = vpop.f32.mrf.mxu0
    %v804 = vpop.f32.mrf.mxu0
    %v805 = vadd.f32 %v576, %v804
    %v806 = vpop.f32.mrf.mxu0
    %807 = vmatprep.mubr.bf16.mxu0 0
    %808 = vmatmul.mubr.bf16.gmra.mxu0 %v655
    %v809 = vpop.f32.mrf.mxu0
    %v810 = vadd.f32 %v581, %v809
    %v811 = vpop.f32.mrf.mxu0
    %v812 = vpop.f32.mrf.mxu0
    %v813 = vadd.f32 %v584, %v812
    %v814 = vpop.f32.mrf.mxu0
    %815 = vmatprep.mubr.bf16.mxu0 0
    %816 = vmatmul.mubr.bf16.gmra.mxu0 %v658
    %v817 = vpop.f32.mrf.mxu0
    %v818 = vadd.f32 %v589, %v817
    %v819 = vpop.f32.mrf.mxu0
    %v820 = vpop.f32.mrf.mxu0
    %v821 = vadd.f32 %v592, %v820
    %v822 = vpop.f32.mrf.mxu0
    %823 = vdwg.mxu0
    %v824 = vpack.c.bf16 %v701, %v698
    %v825 = vpack.c.bf16 %v709, %v706
    %v826 = vpack.c.bf16 %v717, %v714
    %v827 = vpack.c.bf16 %v725, %v722
    %v828 = vpack.c.bf16 %v733, %v730
    %v829 = vpack.c.bf16 %v741, %v738
    %v830 = vpack.c.bf16 %v749, %v746
    %v831 = vpack.c.bf16 %v757, %v754
    %v832 = vpack.c.bf16 %v765, %v762
    %v833 = vpack.c.bf16 %v773, %v770
    %v834 = vpack.c.bf16 %v781, %v778
    %v835 = vpack.c.bf16 %v789, %v786
    %v836 = vpack.c.bf16 %v797, %v794
    %v837 = vpack.c.bf16 %v805, %v802
    %v838 = vpack.c.bf16 %v813, %v810
    %v839 = vpack.c.bf16 %v821, %v818
    %v856 = vunpack.c.l.b16 %v824
    %v857 = vunpack.c.h.b16 %v824
    %v858 = vunpack.c.l.b16 %v825
    %v859 = vunpack.c.h.b16 %v825
    %v860 = vunpack.c.l.b16 %v826
    %v861 = vunpack.c.h.b16 %v826
    %v862 = vunpack.c.l.b16 %v827
    %v863 = vunpack.c.h.b16 %v827
    %v864 = vunpack.c.l.b16 %v828
    %v865 = vunpack.c.h.b16 %v828
    %v866 = vunpack.c.l.b16 %v829
    %v867 = vunpack.c.h.b16 %v829
    %v868 = vunpack.c.l.b16 %v830
    %v869 = vunpack.c.h.b16 %v830
    %v870 = vunpack.c.l.b16 %v831
    %v871 = vunpack.c.h.b16 %v831
    %v872 = vunpack.c.l.b16 %v832
    %v873 = vunpack.c.h.b16 %v832
    %v874 = vunpack.c.l.b16 %v833
    %v875 = vunpack.c.h.b16 %v833
    %v876 = vunpack.c.l.b16 %v834
    %v877 = vunpack.c.h.b16 %v834
    %v878 = vunpack.c.l.b16 %v835
    %v879 = vunpack.c.h.b16 %v835
    %v880 = vunpack.c.l.b16 %v836
    %v881 = vunpack.c.h.b16 %v836
    %v882 = vunpack.c.l.b16 %v837
    %v883 = vunpack.c.h.b16 %v837
    %v884 = vunpack.c.l.b16 %v838
    %v885 = vunpack.c.h.b16 %v838
    %v886 = vunpack.c.l.b16 %v839
    %v887 = vunpack.c.h.b16 %v839
    %v888 = vpack.c.b16 %v856, %v856
    %v889 = vpack.c.b16 %v857, %v857
    %v890 = vpack.c.b16 %v858, %v858
    %v891 = vpack.c.b16 %v859, %v859
    %v892 = vpack.c.b16 %v860, %v860
    %v893 = vpack.c.b16 %v861, %v861
    %v894 = vpack.c.b16 %v862, %v862
    %v895 = vpack.c.b16 %v863, %v863
    %v896 = vpack.c.b16 %v864, %v864
    %v897 = vpack.c.b16 %v865, %v865
    %v898 = vpack.c.b16 %v866, %v866
    %v899 = vpack.c.b16 %v867, %v867
    %v900 = vpack.c.b16 %v868, %v868
    %v901 = vpack.c.b16 %v869, %v869
    %v902 = vpack.c.b16 %v870, %v870
    %v903 = vpack.c.b16 %v871, %v871
    %v904 = vpack.c.b16 %v872, %v872
    %v905 = vpack.c.b16 %v873, %v873
    %v906 = vpack.c.b16 %v874, %v874
    %v907 = vpack.c.b16 %v875, %v875
    %v908 = vpack.c.b16 %v876, %v876
    %v909 = vpack.c.b16 %v877, %v877
    %v910 = vpack.c.b16 %v878, %v878
    %v911 = vpack.c.b16 %v879, %v879
    %v912 = vpack.c.b16 %v880, %v880
    %v913 = vpack.c.b16 %v881, %v881
    %v914 = vpack.c.b16 %v882, %v882
    %v915 = vpack.c.b16 %v883, %v883
    %v916 = vpack.c.b16 %v884, %v884
    %v917 = vpack.c.b16 %v885, %v885
    %v918 = vpack.c.b16 %v886, %v886
    %v919 = vpack.c.b16 %v887, %v887
    %952 = vst [vmem:[#allocation2] sm:$0xf] %v888
    %953 = vst [vmem:[#allocation2 + $0x4] sm:$0xf] %v889
    %954 = vst [vmem:[#allocation2 + $0x8] sm:$0xf] %v890
    %955 = vst [vmem:[#allocation2 + $0xc] sm:$0xf] %v891
    %956 = vst [vmem:[#allocation2 + $0x10] sm:$0xf] %v892
    %957 = vst [vmem:[#allocation2 + $0x14] sm:$0xf] %v893
    %958 = vst [vmem:[#allocation2 + $0x18] sm:$0xf] %v894
    %959 = vst [vmem:[#allocation2 + $0x1c] sm:$0xf] %v895
    %960 = vst [vmem:[#allocation2 + $0x20] sm:$0xf] %v896
    %961 = vst [vmem:[#allocation2 + $0x24] sm:$0xf] %v897
    %962 = vst [vmem:[#allocation2 + $0x28] sm:$0xf] %v898
    %963 = vst [vmem:[#allocation2 + $0x2c] sm:$0xf] %v899
    %964 = vst [vmem:[#allocation2 + $0x30] sm:$0xf] %v900
    %965 = vst [vmem:[#allocation2 + $0x34] sm:$0xf] %v901
    %966 = vst [vmem:[#allocation2 + $0x38] sm:$0xf] %v902
    %967 = vst [vmem:[#allocation2 + $0x3c] sm:$0xf] %v903
    %968 = vst [vmem:[#allocation2 + $0x40] sm:$0xf] %v904
    %969 = vst [vmem:[#allocation2 + $0x44] sm:$0xf] %v905
    %970 = vst [vmem:[#allocation2 + $0x48] sm:$0xf] %v906
    %971 = vst [vmem:[#allocation2 + $0x4c] sm:$0xf] %v907
    %972 = vst [vmem:[#allocation2 + $0x50] sm:$0xf] %v908
    %973 = vst [vmem:[#allocation2 + $0x54] sm:$0xf] %v909
    %974 = vst [vmem:[#allocation2 + $0x58] sm:$0xf] %v910
    %975 = vst [vmem:[#allocation2 + $0x5c] sm:$0xf] %v911
    %976 = vst [vmem:[#allocation2 + $0x60] sm:$0xf] %v912
    %977 = vst [vmem:[#allocation2 + $0x64] sm:$0xf] %v913
    %978 = vst [vmem:[#allocation2 + $0x68] sm:$0xf] %v914
    %979 = vst [vmem:[#allocation2 + $0x6c] sm:$0xf] %v915
    %980 = vst [vmem:[#allocation2 + $0x70] sm:$0xf] %v916
    %981 = vst [vmem:[#allocation2 + $0x74] sm:$0xf] %v917
    %982 = vst [vmem:[#allocation2 + $0x78] sm:$0xf] %v918
    %983 = vst [vmem:[#allocation2 + $0x7c] sm:$0xf] %v919
    // Predicated region
    $region26: #{tpu_custom_call.1} parent=1 // pred_check
      _
    $region27: #{tpu_custom_call.1} parent=1 // pred_check_branch
      %985 = sbr.rel (0) target = $region29
    $region28: #{tpu_custom_call.1} parent=1 // pred_region
      %s987 = ssub.s32 2048, 2048
      %988 = vsyncadd [#allocation3], %s987
      %s989 = sshll.u32 [#allocation2], 4
      %s990 = int_to_ptr.vmem [resolvable:$true] %s989
      %995 = dma.vmem_to_hbm [thread:$0]  %s990, 2048, %s6, [#allocation3], 64, 64, 4
    $region29: #{tpu_custom_call.1} parent=1 // pred_fallthru
      _
    // Predicated region
    $region30: #{tpu_custom_call.1} parent=1 // pred_check
      _
    $region31: #{tpu_custom_call.1} parent=1 // pred_check_branch
      %997 = sbr.rel (0) target = $region33
    $region32: #{tpu_custom_call.1} parent=1 // pred_region
      %998 = dma.done [#allocation3], 2048
    $region33: #{tpu_custom_call.1} parent=1 // pred_fallthru
      _
    %999 = vsyncpa [#allocation3], 1

</llo_original>
